<compile_context>
chip_gen: v5e
topology: v5e:2x2
jax: 0.10.0
libtpu: 0.0.40
codegen_flags: <defaults>
</compile_context>

<pallas_src>
import functools

import jax
import jax.numpy as jnp
from jax.experimental import pallas as pl
from jax.experimental.pallas import tpu as pltpu


def _round_up(x, m):
    return ((x + m - 1) // m) * m


def _layer_norm_kernel(x_ref, gamma_ref, beta_ref, o_ref, *, eps, n_feat):
    x = x_ref[...].astype(jnp.float32)          # (tile_n, F)
    gamma = gamma_ref[...]                      # (1, F), f32
    beta = beta_ref[...]                        # (1, F), f32

    inv_f = jnp.float32(1.0 / n_feat)
    inv_fm1 = jnp.float32(1.0 / max(n_feat - 1, 1))   # Bessel correction (torch .std default)

    mean = jnp.sum(x, axis=-1, keepdims=True) * inv_f          # (tile_n, 1)
    xm = x - mean
    var = jnp.sum(xm * xm, axis=-1, keepdims=True) * inv_fm1   # unbiased variance
    std = jnp.sqrt(var)
    inv = jnp.float32(1.0) / (std + jnp.float32(eps))          # per-row scalar, cheap

    o_ref[...] = (gamma * (xm * inv) + beta).astype(o_ref.dtype)


def layer_norm(x, gamma, beta, *, eps=1e-6, block_rows=256):
    """LayerNorm over the last dim. x: (..., F); gamma, beta: (F,)."""
    orig_shape = x.shape
    feat = orig_shape[-1]
    assert gamma.shape == (feat,) and beta.shape == (feat,)

    x2 = x.reshape(-1, feat)
    n = x2.shape[0]

    # Row tile: multiple of 8 (sublane constraint), capped so VMEM double-buffering
    # stays comfortable even on v7x's smaller VMEM for large F.
    tile_n = min(_round_up(block_rows, 8), _round_up(n, 8))
    n_pad = _round_up(n, tile_n)
    if n_pad != n:
        # Padded rows normalize to `beta` (0/(0+eps)=0) and are sliced off below.
        x2 = jnp.pad(x2, ((0, n_pad - n), (0, 0)))

    gamma2 = gamma.reshape(1, feat).astype(jnp.float32)
    beta2 = beta.reshape(1, feat).astype(jnp.float32)

    kernel = functools.partial(_layer_norm_kernel, eps=eps, n_feat=feat)

    out = pl.pallas_call(
        kernel,
        out_shape=jax.ShapeDtypeStruct((n_pad, feat), x.dtype),
        grid=(n_pad // tile_n,),
        in_specs=[
            pl.BlockSpec((tile_n, feat), lambda i: (i, 0)),   # x row-tile
            pl.BlockSpec((1, feat), lambda i: (0, 0)),        # gamma (resident)
            pl.BlockSpec((1, feat), lambda i: (0, 0)),        # beta  (resident)
        ],
        out_specs=pl.BlockSpec((tile_n, feat), lambda i: (i, 0)),
        compiler_params=pltpu.CompilerParams(
            dimension_semantics=("parallel",),
        ),
    )(x2, gamma2, beta2)

    if n_pad != n:
        out = out[:n]
    return out.reshape(orig_shape)


def _reference(x, gamma, beta, eps=1e-6):
    mean = jnp.mean(x, axis=-1, keepdims=True)
    xm = x - mean
    var = jnp.sum(xm * xm, axis=-1, keepdims=True) / (x.shape[-1] - 1)  # unbiased
    std = jnp.sqrt(var)
    return gamma * xm / (std + eps) + beta


if __name__ == "__main__":
    B, S, H = 2, 8, 32          # batch, seq, hidden (features)
    EPS = 1e-6

    key = jax.random.PRNGKey(0)
    kx, kg, kb = jax.random.split(key, 3)
    x = jax.random.normal(kx, (B, S, H), dtype=jnp.float32)
    gamma = 1.0 + 0.1 * jax.random.normal(kg, (H,), dtype=jnp.float32)
    beta = 0.1 * jax.random.normal(kb, (H,), dtype=jnp.float32)

    out = layer_norm(x, gamma, beta, eps=EPS)
    out = jax.block_until_ready(out)

    ref = _reference(x, gamma, beta, EPS)
    assert out.shape == x.shape
    assert jnp.allclose(out, ref, atol=1e-5, rtol=1e-5), (
        float(jnp.max(jnp.abs(out - ref))))

    print("KERNEL_OK")
</pallas_src>

<mosaic_0001>
module attributes {stable_mosaic.version = 11 : i64} {
  func.func @_layer_norm_kernel(%arg0: i32, %arg1: memref<16x32xf32, #tpu.memory_space<vmem>>, %arg2: memref<1x32xf32, #tpu.memory_space<vmem>>, %arg3: memref<1x32xf32, #tpu.memory_space<vmem>>, %arg4: memref<16x32xf32, #tpu.memory_space<vmem>>) attributes {dimension_semantics = [#tpu.dimension_semantics<parallel>], iteration_bounds = array<i64: 1>, scalar_prefetch = 0 : i64, scratch_operands = 0 : i64, tpu.core_type = #tpu.core_type<tc>, window_params = [{transform_indices = @transform_0, window_bounds = array<i64: 16, 32>}, {pipeline_mode = #tpu.pipeline_mode<synchronous>, transform_indices = @transform_1, window_bounds = array<i64: 1, 32>}, {pipeline_mode = #tpu.pipeline_mode<synchronous>, transform_indices = @transform_2, window_bounds = array<i64: 1, 32>}, {transform_indices = @transform_3, window_bounds = array<i64: 16, 32>}]} {
    %c0 = arith.constant 0 : index
    %c0_0 = arith.constant 0 : index
    %0 = vector.load %arg1[%c0, %c0_0] : memref<16x32xf32, #tpu.memory_space<vmem>>, vector<16x32xf32>
    %c0_1 = arith.constant 0 : index
    %c0_2 = arith.constant 0 : index
    %1 = vector.load %arg2[%c0_1, %c0_2] : memref<1x32xf32, #tpu.memory_space<vmem>>, vector<1x32xf32>
    %c0_3 = arith.constant 0 : index
    %c0_4 = arith.constant 0 : index
    %2 = vector.load %arg3[%c0_3, %c0_4] : memref<1x32xf32, #tpu.memory_space<vmem>>, vector<1x32xf32>
    %cst = arith.constant dense<0.000000e+00> : vector<16xf32>
    %3 = vector.multi_reduction <add>, %0, %cst [1] : vector<16x32xf32> to vector<16xf32>
    %4 = vector.shape_cast %3 : vector<16xf32> to vector<16x1xf32>
    %cst_5 = arith.constant 3.125000e-02 : f32
    %5 = vector.broadcast %cst_5 : f32 to vector<16x1xf32>
    %6 = arith.mulf %4, %5 : vector<16x1xf32>
    %7 = vector.broadcast %6 : vector<16x1xf32> to vector<16x32xf32>
    %8 = arith.subf %0, %7 : vector<16x32xf32>
    %9 = arith.mulf %8, %8 : vector<16x32xf32>
    %cst_6 = arith.constant dense<0.000000e+00> : vector<16xf32>
    %10 = vector.multi_reduction <add>, %9, %cst_6 [1] : vector<16x32xf32> to vector<16xf32>
    %11 = vector.shape_cast %10 : vector<16xf32> to vector<16x1xf32>
    %cst_7 = arith.constant 0.0322580636 : f32
    %12 = vector.broadcast %cst_7 : f32 to vector<16x1xf32>
    %13 = arith.mulf %11, %12 : vector<16x1xf32>
    %14 = math.sqrt %13 : vector<16x1xf32>
    %cst_8 = arith.constant 9.99999997E-7 : f32
    %15 = vector.broadcast %cst_8 : f32 to vector<16x1xf32>
    %16 = arith.addf %14, %15 : vector<16x1xf32>
    %cst_9 = arith.constant 1.000000e+00 : f32
    %17 = vector.broadcast %cst_9 : f32 to vector<16x1xf32>
    %18 = arith.divf %17, %16 : vector<16x1xf32>
    %19 = vector.broadcast %18 : vector<16x1xf32> to vector<16x32xf32>
    %20 = arith.mulf %8, %19 : vector<16x32xf32>
    %21 = vector.broadcast %1 : vector<1x32xf32> to vector<16x32xf32>
    %22 = arith.mulf %21, %20 : vector<16x32xf32>
    %23 = vector.broadcast %2 : vector<1x32xf32> to vector<16x32xf32>
    %24 = arith.addf %22, %23 : vector<16x32xf32>
    %c0_10 = arith.constant 0 : index
    %c0_11 = arith.constant 0 : index
    %25 = vector.load %arg4[%c0_10, %c0_11] : memref<16x32xf32, #tpu.memory_space<vmem>>, vector<16x32xf32>
    tpu.vector_store %arg4[%c0_10, %c0_11], %24 {strides = array<i32>} : memref<16x32xf32, #tpu.memory_space<vmem>>, vector<16x32xf32>,
    return
  }
  func.func @transform_0(%arg0: i32) -> (i32, i32) {
    %c0_i32 = arith.constant 0 : i32
    %c0_i32_0 = arith.constant 0 : i32
    return %arg0, %c0_i32 : i32, i32
  }
  func.func @transform_1(%arg0: i32) -> (i32, i32) {
    %c0_i32 = arith.constant 0 : i32
    %c0_i32_0 = arith.constant 0 : i32
    %c0_i32_1 = arith.constant 0 : i32
    return %c0_i32, %c0_i32_0 : i32, i32
  }
  func.func @transform_2(%arg0: i32) -> (i32, i32) {
    %c0_i32 = arith.constant 0 : i32
    %c0_i32_0 = arith.constant 0 : i32
    %c0_i32_1 = arith.constant 0 : i32
    return %c0_i32, %c0_i32_0 : i32, i32
  }
  func.func @transform_3(%arg0: i32) -> (i32, i32) {
    %c0_i32 = arith.constant 0 : i32
    %c0_i32_0 = arith.constant 0 : i32
    return %arg0, %c0_i32 : i32, i32
  }
}

</mosaic_0001>

<llo_original>
// kernel: tpu_custom_call.1
$region0: #{tpu_custom_call.1}
  #allocation0 [shape = 'u32[]', space=smem, size = 0x4, offset = 0x4, fixed_abs, tag = 'smem constant byte address 0x4 - core index']
  #allocation1 [shape = 'u32[72,128]{1,0:T(1,128)}', space=vmem, size = 0x9000, scoped, tag = 'internal scratch']
  %s0 = inlined_call_operand.hbm [shape: f32[16,32], index: 0, kind: input, shape index: {}]
  %s1 = inlined_call_operand.hbm [shape: f32[1,32], index: 1, kind: input, shape index: {}]
  %s2 = inlined_call_operand.vmem [shape: f32[1,32], index: 2, kind: input, shape index: {}]
  %s3 = inlined_call_operand.hbm [shape: f32[16,32], index: 3, kind: output, shape index: {}]
  %s4 = sld [smem:[#allocation0]]
  $region30: #{tpu_custom_call.1} parent=0
    _
  %s6 = ssub.s32 1, %s4
  %s7 = scalar_select 0, %s6, %s4
  $region1: #{tpu_custom_call.1} parent=0
    #allocation2 [shape = 'u8[8192]{0}', space=vmem, size = 0x2000, scoped, tag = 'input window, operand 0, single buffered']
    #allocation3 [shape = 's32[1]{0}', space=sflag, size = 0x4, scoped, tag = 'scoped memory for tpu_custom_call.1']
    #allocation4 [shape = 's32[1]{0}', space=sflag, size = 0x4, scoped, tag = 'scoped memory for tpu_custom_call.1']
    #allocation5 [shape = 'u8[512]{0}', space=vmem, size = 0x400, scoped, tag = 'input window, operand 1, single buffered']
    #allocation6 [shape = 's32[1]{0}', space=sflag, size = 0x4, scoped, tag = 'scoped memory for tpu_custom_call.1']
    #allocation7 [shape = 'u8[8192]{0}', space=vmem, size = 0x2000, scoped, tag = 'output window, operand 0, single buffered']
    %8 = vsyncpa [#allocation3], 0
    %9 = vsyncpa [#allocation6], 0
    %10 = vsyncpa [#allocation4], 0
    // Predicated region
    $region2: #{tpu_custom_call.1} parent=1 // pred_check
      _
    $region3: #{tpu_custom_call.1} parent=1 // pred_check_branch
      %12 = sbr.rel (0) target = $region5
    $region4: #{tpu_custom_call.1} parent=1 // pred_region
      %14 = vsyncadd [#allocation3], 0
      %s15 = sshll.u32 %s0, 4
      %s16 = int_to_ptr.hbm [resolvable:$true] %s15
      %s17 = sshll.u32 [#allocation2], 4
      %s18 = int_to_ptr.vmem [resolvable:$true] %s17
      %23 = dma.hbm_to_vmem [thread:$0]  %s16, 256, %s18, [#allocation3], 128, 128, 8
    $region5: #{tpu_custom_call.1} parent=1 // pred_fallthru
      _
    // Predicated region
    $region6: #{tpu_custom_call.1} parent=1 // pred_check
      _
    $region7: #{tpu_custom_call.1} parent=1 // pred_check_branch
      %25 = sbr.rel (0) target = $region9
    $region8: #{tpu_custom_call.1} parent=1 // pred_region
      %27 = vsyncadd [#allocation6], 0
      %s29 = sshll.u32 %s1, 4
      %s30 = int_to_ptr.hbm [resolvable:$true] %s29
      %s31 = sshll.u32 [#allocation5], 4
      %s32 = int_to_ptr.vmem [resolvable:$true] %s31
      %34 = dma.hbm_to_vmem [thread:$0]  %s30, 16, %s32, [#allocation6]
    $region9: #{tpu_custom_call.1} parent=1 // pred_fallthru
      _
    // Predicated region
    $region10: #{tpu_custom_call.1} parent=1 // pred_check
      _
    $region11: #{tpu_custom_call.1} parent=1 // pred_check_branch
      %36 = sbr.rel (0) target = $region13
    $region12: #{tpu_custom_call.1} parent=1 // pred_region
      _
    $region13: #{tpu_custom_call.1} parent=1 // pred_fallthru
      _
    // Predicated region
    $region14: #{tpu_custom_call.1} parent=1 // pred_check
      _
    $region15: #{tpu_custom_call.1} parent=1 // pred_check_branch
      %38 = sbr.rel (0) target = $region17
    $region16: #{tpu_custom_call.1} parent=1 // pred_region
      %40 = dma.done [#allocation3], 256
    $region17: #{tpu_custom_call.1} parent=1 // pred_fallthru
      _
    // Predicated region
    $region18: #{tpu_custom_call.1} parent=1 // pred_check
      _
    $region19: #{tpu_custom_call.1} parent=1 // pred_check_branch
      %42 = sbr.rel (0) target = $region21
    $region20: #{tpu_custom_call.1} parent=1 // pred_region
      %44 = dma.done [#allocation6], 16
    $region21: #{tpu_custom_call.1} parent=1 // pred_fallthru
      _
    %v45 = vld [vmem:[#allocation2] sm:$0xff]
    %v46 = vld [vmem:[#allocation2 + $0x8] sm:$0xff]
    %v47 = vld [vmem:[#allocation5] sm:$0x1]
    %v48 = vld [vmem:[%s2] sm:$0x1]
    %vm49 = vcmask 261120
    %v50 = vsel %vm49, %v45, 0.0
    %51 = vadd.xlane.f32.xlu0 %v50
    %v52 = vpop.xlane.xlu0 %51
    %v53 = vsel %vm49, %v46, 0.0
    %54 = vadd.xlane.f32.xlu0 %v53
    %v55 = vpop.xlane.xlu0 %54
    %v56 = vmul.f32 %v52, 0.03125
    %v57 = vmul.f32 %v55, 0.03125
    %v58 = vsub.f32 %v45, %v56
    %v59 = vsub.f32 %v46, %v57
    %v60 = vmul.f32 %v58, %v58
    %v61 = vmul.f32 %v59, %v59
    %v62 = vsel %vm49, %v60, 0.0
    %63 = vadd.xlane.f32.xlu0 %v62
    %v64 = vpop.xlane.xlu0 %63
    %v65 = vsel %vm49, %v61, 0.0
    %66 = vadd.xlane.f32.xlu0 %v65
    %v67 = vpop.xlane.xlu0 %66
    %v68 = vmul.f32 %v64, 0.032258064
    %v69 = vmul.f32 %v67, 0.032258064
    %v70 = vrsqrt.pop %v68
    %v71 = vmul.f32 %v70, %v68
    %v72 = vmul.f32 %v71, %v70
    %v73 = vmul.f32 0.5, %v72
    %v74 = vsub.f32 1.5, %v73
    %v75 = vmul.f32 %v70, %v74
    %v76 = vmul.f32 %v68, %v75
    %vm77 = vcmp.eq.f32.partialorder %v68, inf
    %v78 = vsel %vm77, %v68, %v76
    %vm79 = vcmp.eq.f32.partialorder %v68, 0.0
    %v80 = vand.u32 %v68, 2147483648
    %v81 = vsel %vm79, %v80, %v78
    %v82 = vrsqrt.pop %v69
    %v83 = vmul.f32 %v82, %v69
    %v84 = vmul.f32 %v83, %v82
    %v85 = vmul.f32 0.5, %v84
    %v86 = vsub.f32 1.5, %v85
    %v87 = vmul.f32 %v82, %v86
    %v88 = vmul.f32 %v69, %v87
    %vm89 = vcmp.eq.f32.partialorder %v69, inf
    %v90 = vsel %vm89, %v69, %v88
    %vm91 = vcmp.eq.f32.partialorder %v69, 0.0
    %v92 = vand.u32 %v69, 2147483648
    %v93 = vsel %vm91, %v92, %v90
    %v94 = vadd.f32 %v81, 1e-06
    %v95 = vadd.f32 %v93, 1e-06
    %v96 = vrcp.pop %v94
    %v97 = vmul.f32 %v94, %v96
    %v98 = vsub.f32 1.0, %v97
    %v99 = vmul.f32 %v96, %v98
    %v100 = vadd.f32 %v96, %v99
    %vm101 = vweird.f32 %v94
    %vm102 = vweird.f32 %v96
    %vm103 = vmor %vm101, %vm102
    %v104 = vsel %vm103, %v96, %v100
    %v105 = vand.u32 2147483647, %v94
    %vm106 = vcmp.eq.f32.partialorder %v105, 8.507059e+37
    %v107 = vand.u32 %v94, 2147483648
    %v108 = vor.u32 1.1754944e-38, %v107
    %v109 = vsel %vm106, %v108, %v104
    %v110 = vmul.f32 1.0, %v109
    %v111 = vrcp.pop %v95
    %v112 = vmul.f32 %v95, %v111
    %v113 = vsub.f32 1.0, %v112
    %v114 = vmul.f32 %v111, %v113
    %v115 = vadd.f32 %v111, %v114
    %vm116 = vweird.f32 %v95
    %vm117 = vweird.f32 %v111
    %vm118 = vmor %vm116, %vm117
    %v119 = vsel %vm118, %v111, %v115
    %v120 = vand.u32 2147483647, %v95
    %vm121 = vcmp.eq.f32.partialorder %v120, 8.507059e+37
    %v122 = vand.u32 %v95, 2147483648
    %v123 = vor.u32 1.1754944e-38, %v122
    %v124 = vsel %vm121, %v123, %v119
    %v125 = vmul.f32 1.0, %v124
    %v126 = vmul.f32 %v58, %v110
    %v127 = vmul.f32 %v59, %v125
    %v129 = vperm.slane %v47, 0
    %v131 = vmul.f32 %v129, %v126
    %v132 = vmul.f32 %v129, %v127
    %v134 = vperm.slane %v48, 0
    %v136 = vadd.f32 %v131, %v134
    %v137 = vadd.f32 %v132, %v134
    %138 = vst.msk [vmem:[#allocation7] sm:$0xff] %vm49, %v136
    %139 = vst.msk [vmem:[#allocation7 + $0x8] sm:$0xff] %vm49, %v137
    // Predicated region
    $region22: #{tpu_custom_call.1} parent=1 // pred_check
      _
    $region23: #{tpu_custom_call.1} parent=1 // pred_check_branch
      %141 = sbr.rel (0) target = $region25
    $region24: #{tpu_custom_call.1} parent=1 // pred_region
      %143 = vsyncadd [#allocation4], 0
      %s144 = sshll.u32 [#allocation7], 4
      %s145 = int_to_ptr.vmem [resolvable:$true] %s144
      %s146 = sshll.u32 %s3, 4
      %s147 = int_to_ptr.hbm [resolvable:$true] %s146
      %152 = dma.vmem_to_hbm [thread:$0]  %s145, 256, %s147, [#allocation4], 128, 128, 8
    $region25: #{tpu_custom_call.1} parent=1 // pred_fallthru
      _
    // Predicated region
    $region26: #{tpu_custom_call.1} parent=1 // pred_check
      _
    $region27: #{tpu_custom_call.1} parent=1 // pred_check_branch
      %154 = sbr.rel (0) target = $region29
    $region28: #{tpu_custom_call.1} parent=1 // pred_region
      %156 = dma.done [#allocation4], 256
    $region29: #{tpu_custom_call.1} parent=1 // pred_fallthru
      _
    %157 = vsyncpa [#allocation3], 1
    %158 = vsyncpa [#allocation6], 1
    %159 = vsyncpa [#allocation4], 1

</llo_original>
